<compile_context>
chip_gen: v7x
topology: tpu7x:2x2x1
jax: 0.10.0
libtpu: 0.0.40
codegen_flags: <defaults>
</compile_context>

<pallas_src>
import math

import jax
import jax.numpy as jnp
from jax.experimental import pallas as pl
from jax.experimental.pallas import tpu as pltpu

IN_FEATURES = 784   # 28*28, unpadded (block == full array dim is legal)
HID = 128
N_PAD = 128         # 10 logits padded to one full lane group (lane-dense vst)
TM_MAX = 2048       # max batch tile; ~14 MB double-buffered, fits default VMEM


def _cdiv(a, b):
    return -(-a // b)


def _round_up(x, m):
    return _cdiv(x, m) * m


def mlp_kernel(x_ref, w1_ref, b1_ref, w2_ref, b2_ref, o_ref):
    # x_ref:  [TM, 784] f32  (cast to bf16 here; VPU has slack, halves x HBM read)
    # w1_ref: [784, 128] bf16   b1_ref: [1, 128] f32
    # w2_ref: [128, 128] bf16   b2_ref: [1, 128] f32
    # o_ref:  [TM, 128] bf16    (f32 accumulate in the MXU, bf16 writeback)
    x_bf = x_ref[...].astype(jnp.bfloat16)
    h = jnp.dot(x_bf, w1_ref[...], preferred_element_type=jnp.float32)
    h = jnp.maximum(h + b1_ref[...], 0.0)                 # bias + ReLU in f32
    out = jnp.dot(h.astype(jnp.bfloat16), w2_ref[...],
                  preferred_element_type=jnp.float32)
    o_ref[...] = (out + b2_ref[...]).astype(o_ref.dtype)


def prepare_params(w1, b1, w2, b2):
    """One-time padding + bf16 cast of the weights (hoisted out of forward)."""
    w1_bf = w1.astype(jnp.bfloat16)                        # [784, 128]
    w2_bf = jnp.pad(w2, ((0, 0), (0, N_PAD - 10))).astype(jnp.bfloat16)
    b2_p = jnp.pad(b2, ((0, 0), (0, N_PAD - 10)))          # padded lanes are zero
    return w1_bf, b1, w2_bf, b2_p


def simple_nn_forward(x_nchw, params):
    """x_nchw: [B, 1, 28, 28] float32 -> logits [B, 10] float32 (bf16-accurate)."""
    w1_bf, b1, w2_bf, b2_p = params
    B = x_nchw.shape[0]
    x_flat = x_nchw.reshape(B, IN_FEATURES)                # nn.Flatten (free)

    # Choose grid steps first (>= 2 so both v7x TCs get work and the x DMA
    # double-buffers), then the batch tile, so padding stays < 16*steps rows.
    n_steps = max(2, _cdiv(B, TM_MAX))
    TM = _round_up(_cdiv(B, n_steps), 16)   # 16: bf16 output sublane packing
    B_pad = n_steps * TM

    x_p = x_flat if B_pad == B else jnp.pad(x_flat, ((0, B_pad - B), (0, 0)))

    flops = 2 * B_pad * IN_FEATURES * HID + 2 * B_pad * HID * N_PAD
    bytes_accessed = (x_p.size * 4 + w1_bf.size * 2 + b1.size * 4
                      + w2_bf.size * 2 + b2_p.size * 4 + B_pad * N_PAD * 2)

    out_pad = pl.pallas_call(
        mlp_kernel,
        out_shape=jax.ShapeDtypeStruct((B_pad, N_PAD), jnp.bfloat16),
        grid_spec=pl.GridSpec(
            grid=(n_steps,),
            in_specs=[
                pl.BlockSpec((TM, IN_FEATURES), lambda i: (i, 0)),   # x: batch-tiled, f32
                pl.BlockSpec((IN_FEATURES, HID), lambda i: (0, 0)),  # w1: VMEM-resident
                pl.BlockSpec((1, HID), lambda i: (0, 0)),            # b1: resident
                pl.BlockSpec((HID, N_PAD), lambda i: (0, 0)),        # w2: resident
                pl.BlockSpec((1, N_PAD), lambda i: (0, 0)),          # b2: resident
            ],
            out_specs=pl.BlockSpec((TM, N_PAD), lambda i: (i, 0)),
        ),
        compiler_params=pltpu.CompilerParams(
            dimension_semantics=("parallel",),             # shard batch over 2 TCs on v7x
        ),
        cost_estimate=pl.CostEstimate(
            flops=flops, transcendentals=0, bytes_accessed=bytes_accessed),
    )(x_p, w1_bf, b1, w2_bf, b2_p)

    # Only 10 of 128 lanes / B of B_pad rows are real; slice + upcast is B*10 elems.
    return out_pad[:B, :10].astype(jnp.float32)


def init_params(key):
    """nn.Linear default init (U[-1/sqrt(fan_in), 1/sqrt(fan_in)]).

    Weights are stored [in, out] (transposed vs PyTorch) for the kernel.
    """
    k1, k2, k3, k4 = jax.random.split(key, 4)
    bound1 = 1.0 / math.sqrt(784)
    bound2 = 1.0 / math.sqrt(128)
    w1 = jax.random.uniform(k1, (784, 128), jnp.float32, -bound1, bound1)
    b1 = jax.random.uniform(k2, (1, 128), jnp.float32, -bound1, bound1)
    w2 = jax.random.uniform(k3, (128, 10), jnp.float32, -bound2, bound2)
    b2 = jax.random.uniform(k4, (1, 10), jnp.float32, -bound2, bound2)
    return w1, b1, w2, b2


if __name__ == "__main__":
    key = jax.random.PRNGKey(0)
    k_x, k_p = jax.random.split(key)

    B = 8
    x = jax.random.normal(k_x, (B, 1, 28, 28), jnp.float32)  # NCHW like MNIST
    w1, b1, w2, b2 = init_params(k_p)
    params = prepare_params(w1, b1, w2, b2)                   # once, at init

    fwd = jax.jit(simple_nn_forward)
    logits = fwd(x, params)
    jax.block_until_ready(logits)

    # Pure-JAX reference emulating the kernel's bf16-input / f32-accumulate /
    # bf16-output path (deliberate precision tradeoff vs true f32 PyTorch).
    xf = x.reshape(B, -1).astype(jnp.bfloat16).astype(jnp.float32)
    w1f = w1.astype(jnp.bfloat16).astype(jnp.float32)
    w2f = w2.astype(jnp.bfloat16).astype(jnp.float32)
    h = jnp.maximum(xf @ w1f + b1, 0.0)
    ref = h.astype(jnp.bfloat16).astype(jnp.float32) @ w2f + b2
    ref = ref.astype(jnp.bfloat16).astype(jnp.float32)

    assert logits.shape == (B, 10)
    assert jnp.allclose(logits, ref, atol=2e-2, rtol=2e-2)

    print("KERNEL_OK")
</pallas_src>

<mosaic_0001>
module attributes {stable_mosaic.version = 11 : i64} {
  func.func @mlp_kernel(%arg0: i32, %arg1: memref<16x784xf32, #tpu.memory_space<vmem>>, %arg2: memref<784x128xbf16, #tpu.memory_space<vmem>>, %arg3: memref<1x128xf32, #tpu.memory_space<vmem>>, %arg4: memref<128x128xbf16, #tpu.memory_space<vmem>>, %arg5: memref<1x128xf32, #tpu.memory_space<vmem>>, %arg6: memref<16x128xbf16, #tpu.memory_space<vmem>>) attributes {dimension_semantics = [#tpu.dimension_semantics<parallel>], iteration_bounds = array<i64: 2>, scalar_prefetch = 0 : i64, scratch_operands = 0 : i64, tpu.core_type = #tpu.core_type<tc>, window_params = [{transform_indices = @transform_0, window_bounds = array<i64: 16, 784>}, {pipeline_mode = #tpu.pipeline_mode<synchronous>, transform_indices = @transform_1, window_bounds = array<i64: 784, 128>}, {pipeline_mode = #tpu.pipeline_mode<synchronous>, transform_indices = @transform_2, window_bounds = array<i64: 1, 128>}, {pipeline_mode = #tpu.pipeline_mode<synchronous>, transform_indices = @transform_3, window_bounds = array<i64: 128, 128>}, {pipeline_mode = #tpu.pipeline_mode<synchronous>, transform_indices = @transform_4, window_bounds = array<i64: 1, 128>}, {transform_indices = @transform_5, window_bounds = array<i64: 16, 128>}]} {
    %c0 = arith.constant 0 : index
    %c0_0 = arith.constant 0 : index
    %0 = vector.load %arg1[%c0, %c0_0] : memref<16x784xf32, #tpu.memory_space<vmem>>, vector<16x784xf32>
    %1 = arith.truncf %0 : vector<16x784xf32> to vector<16x784xbf16>
    %c0_1 = arith.constant 0 : index
    %c0_2 = arith.constant 0 : index
    %2 = vector.load %arg2[%c0_1, %c0_2] : memref<784x128xbf16, #tpu.memory_space<vmem>>, vector<784x128xbf16>
    %cst = arith.constant dense<0.000000e+00> : vector<16x128xf32>
    %3 = tpu.matmul %1, %2, %cst {dimension_numbers = #tpu.dot_dimension_numbers<[1], [0], [0], [1], [0, 0, 1, 1], [], []>} : vector<16x784xbf16>, vector<784x128xbf16>, vector<16x128xf32> -> vector<16x128xf32>
    %c0_3 = arith.constant 0 : index
    %c0_4 = arith.constant 0 : index
    %4 = vector.load %arg3[%c0_3, %c0_4] : memref<1x128xf32, #tpu.memory_space<vmem>>, vector<1x128xf32>
    %5 = vector.broadcast %4 : vector<1x128xf32> to vector<16x128xf32>
    %6 = arith.addf %3, %5 : vector<16x128xf32>
    %cst_5 = arith.constant 0.000000e+00 : f32
    %7 = vector.broadcast %cst_5 : f32 to vector<16x128xf32>
    %8 = arith.maximumf %6, %7 : vector<16x128xf32>
    %9 = arith.truncf %8 : vector<16x128xf32> to vector<16x128xbf16>
    %c0_6 = arith.constant 0 : index
    %c0_7 = arith.constant 0 : index
    %10 = vector.load %arg4[%c0_6, %c0_7] : memref<128x128xbf16, #tpu.memory_space<vmem>>, vector<128x128xbf16>
    %cst_8 = arith.constant dense<0.000000e+00> : vector<16x128xf32>
    %11 = tpu.matmul %9, %10, %cst_8 {dimension_numbers = #tpu.dot_dimension_numbers<[1], [0], [0], [1], [0, 0, 1, 1], [], []>} : vector<16x128xbf16>, vector<128x128xbf16>, vector<16x128xf32> -> vector<16x128xf32>
    %c0_9 = arith.constant 0 : index
    %c0_10 = arith.constant 0 : index
    %12 = vector.load %arg5[%c0_9, %c0_10] : memref<1x128xf32, #tpu.memory_space<vmem>>, vector<1x128xf32>
    %13 = vector.broadcast %12 : vector<1x128xf32> to vector<16x128xf32>
    %14 = arith.addf %11, %13 : vector<16x128xf32>
    %15 = arith.truncf %14 : vector<16x128xf32> to vector<16x128xbf16>
    %c0_11 = arith.constant 0 : index
    %c0_12 = arith.constant 0 : index
    %16 = vector.load %arg6[%c0_11, %c0_12] : memref<16x128xbf16, #tpu.memory_space<vmem>>, vector<16x128xbf16>
    tpu.vector_store %arg6[%c0_11, %c0_12], %15 {strides = array<i32>} : memref<16x128xbf16, #tpu.memory_space<vmem>>, vector<16x128xbf16>,
    return
  }
  func.func @transform_0(%arg0: i32) -> (i32, i32) {
    %c0_i32 = arith.constant 0 : i32
    %c0_i32_0 = arith.constant 0 : i32
    return %arg0, %c0_i32 : i32, i32
  }
  func.func @transform_1(%arg0: i32) -> (i32, i32) {
    %c0_i32 = arith.constant 0 : i32
    %c0_i32_0 = arith.constant 0 : i32
    %c0_i32_1 = arith.constant 0 : i32
    return %c0_i32, %c0_i32_0 : i32, i32
  }
  func.func @transform_2(%arg0: i32) -> (i32, i32) {
    %c0_i32 = arith.constant 0 : i32
    %c0_i32_0 = arith.constant 0 : i32
    %c0_i32_1 = arith.constant 0 : i32
    return %c0_i32, %c0_i32_0 : i32, i32
  }
  func.func @transform_3(%arg0: i32) -> (i32, i32) {
    %c0_i32 = arith.constant 0 : i32
    %c0_i32_0 = arith.constant 0 : i32
    %c0_i32_1 = arith.constant 0 : i32
    return %c0_i32, %c0_i32_0 : i32, i32
  }
  func.func @transform_4(%arg0: i32) -> (i32, i32) {
    %c0_i32 = arith.constant 0 : i32
    %c0_i32_0 = arith.constant 0 : i32
    %c0_i32_1 = arith.constant 0 : i32
    return %c0_i32, %c0_i32_0 : i32, i32
  }
  func.func @transform_5(%arg0: i32) -> (i32, i32) {
    %c0_i32 = arith.constant 0 : i32
    %c0_i32_0 = arith.constant 0 : i32
    return %arg0, %c0_i32 : i32, i32
  }
}

</mosaic_0001>

<llo_original>
// kernel: simple_nn_forward.1
$region0: #{simple_nn_forward.1}
  #allocation0 [shape = 'u32[]', space=smem, size = 0x4, offset = 0x4, fixed_abs, tag = 'smem constant byte address 0x4 - core index']
  #allocation1 [shape = 'u32[144,128]{1,0:T(1,128)}', space=vmem, size = 0x12000, scoped, tag = 'internal scratch']
  %s0 = inlined_call_operand.vmem [shape: f32[32,784], index: 0, kind: input, shape index: {}]
  %s1 = inlined_call_operand.vmem [shape: bf16[784,128], index: 1, kind: input, shape index: {}]
  %s2 = inlined_call_operand.vmem [shape: f32[1,128], index: 2, kind: input, shape index: {}]
  %s3 = inlined_call_operand.vmem [shape: bf16[128,128], index: 3, kind: input, shape index: {}]
  %s4 = inlined_call_operand.vmem [shape: f32[1,128], index: 4, kind: input, shape index: {}]
  %s5 = inlined_call_operand.vmem [shape: bf16[32,128], index: 5, kind: output, shape index: {}]
  %s6 = sld [smem:[#allocation0]]
  $region53: #{simple_nn_forward.1} parent=0
    _
  %s8 = ssub.s32 1, %s6
  %s9 = scalar_select 0, %s8, %s6
  loop: start=0, step=1, limit=4
  $region2: #{simple_nn_forward.1} parent=0 // loop_pre_header
    _
  $region3: #{simple_nn_forward.1} parent=0 // loop_header
    %s11 = sphi 0, %s15
    %p12 = scmp.ge.s32.totalorder %s11, 4
    %s21 = sphi 0, %s23
    %s24 = sphi 0, %s21
    %s25 = sphi 0, %s24
    %s41 = sphi 0, %s25
    %s45 = sphi 0, %s45
    %s47 = sphi 0, %s45
    %s48 = sphi 0, %s47
    %s62 = sphi 0, %s48
    %s66 = sphi 0, %s66
    %s68 = sphi 0, %s66
    %s69 = sphi 0, %s68
    %s83 = sphi 0, %s69
    %s87 = sphi 0, %s87
    %s89 = sphi 0, %s87
    %s90 = sphi 0, %s89
    %s104 = sphi 0, %s90
    %s108 = sphi 0, %s108
    %s110 = sphi 0, %s108
    %s111 = sphi 0, %s110
    %s125 = sphi 0, %s111
    %s131 = sphi 0, %s133
    %s134 = sphi 0, %s131
    %s135 = sphi 0, %s134
    %s151 = sphi 0, %s135
  $region4: #{simple_nn_forward.1} parent=0 // loop_header_branch
    %14 = sbr.rel (%p12) target = $region8
  $region5: #{simple_nn_forward.1} parent=0 // loop_body
    %s16 = ssub.s32 %s11, 1
    %s17 = ssub.s32 %s11, 2
    %s18 = sadd.s32 %s11, 1
    %s19 = ssub.s32 %s11, %s18
    %p20 = scmp.eq.s32.totalorder %s19, 0
    %s22 = sadd.s32 %s21, 1
    %s23 = scalar_select %p20, %s21, %s22
    %p26 = pneg %p20
    %p27 = scmp.eq.s32.totalorder %s11, 1
    %p28 = por %p26, %p27
    %p29 = scmp.ne.s32.totalorder %s21, %s24
    %p30 = scmp.eq.s32.totalorder %s11, 0
    %p31 = por %p29, %p30
    %p32 = scmp.ne.s32.totalorder %s21, %s24
    %p33 = scmp.eq.s32.totalorder %s16, 1
    %p34 = por %p32, %p33
    %p35 = scmp.ne.s32.totalorder %s24, %s25
    %p36 = scmp.eq.s32.totalorder %s16, 0
    %p37 = por %p35, %p36
    %p38 = scmp.ne.s32.totalorder %s24, %s25
    %p39 = scmp.eq.s32.totalorder %s17, 1
    %p40 = por %p38, %p39
    %p42 = scmp.ne.s32.totalorder %s25, %s41
    %p43 = scmp.eq.s32.totalorder %s17, 0
    %p44 = por %p42, %p43
    %s46 = sadd.s32 %s45, 1
    %p49 = scmp.eq.s32.totalorder %s11, 1
    %p50 = scmp.ne.s32.totalorder %s45, %s47
    %p51 = scmp.eq.s32.totalorder %s11, 0
    %p52 = por %p50, %p51
    %p53 = scmp.ne.s32.totalorder %s45, %s47
    %p54 = scmp.eq.s32.totalorder %s16, 1
    %p55 = por %p53, %p54
    %p56 = scmp.ne.s32.totalorder %s47, %s48
    %p57 = scmp.eq.s32.totalorder %s16, 0
    %p58 = por %p56, %p57
    %p59 = scmp.ne.s32.totalorder %s47, %s48
    %p60 = scmp.eq.s32.totalorder %s17, 1
    %p61 = por %p59, %p60
    %p63 = scmp.ne.s32.totalorder %s48, %s62
    %p64 = scmp.eq.s32.totalorder %s17, 0
    %p65 = por %p63, %p64
    %s67 = sadd.s32 %s66, 1
    %p70 = scmp.eq.s32.totalorder %s11, 1
    %p71 = scmp.ne.s32.totalorder %s66, %s68
    %p72 = scmp.eq.s32.totalorder %s11, 0
    %p73 = por %p71, %p72
    %p74 = scmp.ne.s32.totalorder %s66, %s68
    %p75 = scmp.eq.s32.totalorder %s16, 1
    %p76 = por %p74, %p75
    %p77 = scmp.ne.s32.totalorder %s68, %s69
    %p78 = scmp.eq.s32.totalorder %s16, 0
    %p79 = por %p77, %p78
    %p80 = scmp.ne.s32.totalorder %s68, %s69
    %p81 = scmp.eq.s32.totalorder %s17, 1
    %p82 = por %p80, %p81
    %p84 = scmp.ne.s32.totalorder %s69, %s83
    %p85 = scmp.eq.s32.totalorder %s17, 0
    %p86 = por %p84, %p85
    %s88 = sadd.s32 %s87, 1
    %p91 = scmp.eq.s32.totalorder %s11, 1
    %p92 = scmp.ne.s32.totalorder %s87, %s89
    %p93 = scmp.eq.s32.totalorder %s11, 0
    %p94 = por %p92, %p93
    %p95 = scmp.ne.s32.totalorder %s87, %s89
    %p96 = scmp.eq.s32.totalorder %s16, 1
    %p97 = por %p95, %p96
    %p98 = scmp.ne.s32.totalorder %s89, %s90
    %p99 = scmp.eq.s32.totalorder %s16, 0
    %p100 = por %p98, %p99
    %p101 = scmp.ne.s32.totalorder %s89, %s90
    %p102 = scmp.eq.s32.totalorder %s17, 1
    %p103 = por %p101, %p102
    %p105 = scmp.ne.s32.totalorder %s90, %s104
    %p106 = scmp.eq.s32.totalorder %s17, 0
    %p107 = por %p105, %p106
    %s109 = sadd.s32 %s108, 1
    %p112 = scmp.eq.s32.totalorder %s11, 1
    %p113 = scmp.ne.s32.totalorder %s108, %s110
    %p114 = scmp.eq.s32.totalorder %s11, 0
    %p115 = por %p113, %p114
    %p116 = scmp.ne.s32.totalorder %s108, %s110
    %p117 = scmp.eq.s32.totalorder %s16, 1
    %p118 = por %p116, %p117
    %p119 = scmp.ne.s32.totalorder %s110, %s111
    %p120 = scmp.eq.s32.totalorder %s16, 0
    %p121 = por %p119, %p120
    %p122 = scmp.ne.s32.totalorder %s110, %s111
    %p123 = scmp.eq.s32.totalorder %s17, 1
    %p124 = por %p122, %p123
    %p126 = scmp.ne.s32.totalorder %s111, %s125
    %p127 = scmp.eq.s32.totalorder %s17, 0
    %p128 = por %p126, %p127
    %s129 = ssub.s32 %s11, %s18
    %p130 = scmp.eq.s32.totalorder %s129, 0
    %s132 = sadd.s32 %s131, 1
    %s133 = scalar_select %p130, %s131, %s132
    %p136 = pneg %p130
    %p137 = scmp.eq.s32.totalorder %s11, 1
    %p138 = por %p136, %p137
    %p139 = scmp.ne.s32.totalorder %s131, %s134
    %p140 = scmp.eq.s32.totalorder %s11, 0
    %p141 = por %p139, %p140
    %p142 = scmp.ne.s32.totalorder %s131, %s134
    %p143 = scmp.eq.s32.totalorder %s16, 1
    %p144 = por %p142, %p143
    %p145 = scmp.ne.s32.totalorder %s134, %s135
    %p146 = scmp.eq.s32.totalorder %s16, 0
    %p147 = por %p145, %p146
    %p148 = scmp.ne.s32.totalorder %s134, %s135
    %p149 = scmp.eq.s32.totalorder %s17, 1
    %p150 = por %p148, %p149
    %p152 = scmp.ne.s32.totalorder %s135, %s151
    %p153 = scmp.eq.s32.totalorder %s17, 0
    %p154 = por %p152, %p153
    %p155 = scmp.le.s32.totalorder 1, %s11
    %p156 = scmp.lt.s32.totalorder %s11, 3
    %p157 = pnand %p155, %p156
    %p158 = pneg %p157
    // Predicated region
    $region9: #{simple_nn_forward.1} parent=5 // pred_check
      _
    $region10: #{simple_nn_forward.1} parent=5 // pred_check_branch
      %160 = sbr.rel (%p157) target = $region12
    $region11: #{simple_nn_forward.1} parent=5 // pred_region
      %s161 = ssub.s32 %s11, 1
      // Predicated region
      $region13: #{simple_nn_forward.1} parent=11 // pred_check
        %p162 = pneg %p58
      $region14: #{simple_nn_forward.1} parent=11 // pred_check_branch
        %164 = sbr.rel (%p162) target = $region16
      $region15: #{simple_nn_forward.1} parent=11 // pred_region
        _
      $region16: #{simple_nn_forward.1} parent=11 // pred_fallthru
        _
      // Predicated region
      $region17: #{simple_nn_forward.1} parent=11 // pred_check
        %p165 = pneg %p79
      $region18: #{simple_nn_forward.1} parent=11 // pred_check_branch
        %167 = sbr.rel (%p165) target = $region20
      $region19: #{simple_nn_forward.1} parent=11 // pred_region
        _
      $region20: #{simple_nn_forward.1} parent=11 // pred_fallthru
        _
      // Predicated region
      $region21: #{simple_nn_forward.1} parent=11 // pred_check
        %p168 = pneg %p100
      $region22: #{simple_nn_forward.1} parent=11 // pred_check_branch
        %170 = sbr.rel (%p168) target = $region24
      $region23: #{simple_nn_forward.1} parent=11 // pred_region
        _
      $region24: #{simple_nn_forward.1} parent=11 // pred_fallthru
        _
      // Predicated region
      $region25: #{simple_nn_forward.1} parent=11 // pred_check
        %p171 = pneg %p121
      $region26: #{simple_nn_forward.1} parent=11 // pred_check_branch
        %173 = sbr.rel (%p171) target = $region28
      $region27: #{simple_nn_forward.1} parent=11 // pred_region
        _
      $region28: #{simple_nn_forward.1} parent=11 // pred_fallthru
        _
    $region12: #{simple_nn_forward.1} parent=5 // pred_fallthru
      _
    %p174 = scmp.lt.s32.totalorder %s11, 2
    // Predicated region
    $region29: #{simple_nn_forward.1} parent=5 // pred_check
      %p175 = pneg %p174
    $region30: #{simple_nn_forward.1} parent=5 // pred_check_branch
      %177 = sbr.rel (%p175) target = $region32
    $region31: #{simple_nn_forward.1} parent=5 // pred_region
      // Predicated region
      $region33: #{simple_nn_forward.1} parent=31 // pred_check
        %p178 = pneg %p31
      $region34: #{simple_nn_forward.1} parent=31 // pred_check_branch
        %180 = sbr.rel (%p178) target = $region36
      $region35: #{simple_nn_forward.1} parent=31 // pred_region
        %s181 = smul.u32 2, %s11
        %p182 = scmp.lt.s32.totalorder %s181, 3
        %s183 = scalar_select %p182, %s181, 3
        %s184 = smul.addr %s183, 7
        %s185 = smul.addr %s184, 8
        %s186 = scalar_lea.vmem %s0, %s185
        %s187 = smul.u32 2, %s11
      $region36: #{simple_nn_forward.1} parent=31 // pred_fallthru
        _
    $region32: #{simple_nn_forward.1} parent=5 // pred_fallthru
      _
    %p188 = scmp.le.s32.totalorder 1, %s11
    %p189 = scmp.lt.s32.totalorder %s11, 3
    %p190 = pnand %p188, %p189
    %p191 = pneg %p190
    // Predicated region
    $region37: #{simple_nn_forward.1} parent=5 // pred_check
      _
    $region38: #{simple_nn_forward.1} parent=5 // pred_check_branch
      %193 = sbr.rel (%p190) target = $region40
    $region39: #{simple_nn_forward.1} parent=5 // pred_region
      %s194 = ssub.s32 %s11, 1
      %s195 = smul.u32 2, %s16
      %p196 = scmp.lt.s32.totalorder %s195, 3
      %s197 = scalar_select %p196, %s195, 3
      %s198 = smul.addr %s197, 7
      %s199 = smul.addr %s198, 8
      %s200 = scalar_lea.vmem %s0, %s199
      %p201 = pneg %p37
      %p202 = pneg %p34
      %p203 = pneg %p58
      %p204 = pneg %p55
      %p205 = pneg %p79
      %p206 = pneg %p76
      %p207 = pneg %p100
      %p208 = pneg %p97
      %p209 = pneg %p121
      %p210 = pneg %p118
      %p211 = pneg %p147
      %p212 = pneg %p144
      %s213 = smul.u32 2, %s16
      %p214 = scmp.lt.s32.totalorder %s213, 3
      %s215 = scalar_select %p214, %s213, 3
      %s216 = smul.addr %s215, 4
      %s217 = scalar_lea.vmem %s5, %s216
      %s218 = smul.u32 2, %s16
      %p219 = scmp.lt.s32.totalorder %s218, 3
      %s220 = scalar_select %p219, %s218, 3
      %s221 = smul.addr %s220, 7
      %s222 = smul.addr %s221, 8
      %s223 = scalar_lea.vmem %s0, %s222
      %s224 = smul.u32 2, %s16
      %s225 = smul.u32 2, %s16
      %p226 = scmp.lt.s32.totalorder %s225, 3
      %s227 = scalar_select %p226, %s225, 3
      %s228 = smul.addr %s227, 4
      %s229 = scalar_lea.vmem %s5, %s228
      %s230 = smul.u32 2, %s16
      %v232 = vld [vmem:[%s223] sm:$0xff]
      %v233 = vld [vmem:[%s223 + $0x8] sm:$0xff]
      %v234 = vld [vmem:[%s223 + $0x10] sm:$0xff]
      %v235 = vld [vmem:[%s223 + $0x18] sm:$0xff]
      %v236 = vld [vmem:[%s223 + $0x20] sm:$0xff]
      %v237 = vld [vmem:[%s223 + $0x28] sm:$0xff]
      %v238 = vld [vmem:[%s223 + $0x30] sm:$0xff]
      %v239 = vld [vmem:[%s223 + $0x38] sm:$0xff]
      %v240 = vld [vmem:[%s223 + $0x40] sm:$0xff]
      %v241 = vld [vmem:[%s223 + $0x48] sm:$0xff]
      %v242 = vld [vmem:[%s223 + $0x50] sm:$0xff]
      %v243 = vld [vmem:[%s223 + $0x58] sm:$0xff]
      %v244 = vld [vmem:[%s223 + $0x60] sm:$0xff]
      %v245 = vld [vmem:[%s223 + $0x68] sm:$0xff]
      %v246 = vpack.c.bf16 %v239, %v232
      %v247 = vpack.c.bf16 %v240, %v233
      %v248 = vpack.c.bf16 %v241, %v234
      %v249 = vpack.c.bf16 %v242, %v235
      %v250 = vpack.c.bf16 %v243, %v236
      %v251 = vpack.c.bf16 %v244, %v237
      %v252 = vpack.c.bf16 %v245, %v238
      %v253 = vld [vmem:[%s1] sm:$0xf]
      %v254 = vld [vmem:[%s1 + $0x4] sm:$0xf]
      %v255 = vld [vmem:[%s1 + $0x8] sm:$0xf]
      %v256 = vld [vmem:[%s1 + $0xc] sm:$0xf]
      %v257 = vld [vmem:[%s1 + $0x10] sm:$0xf]
      %v258 = vld [vmem:[%s1 + $0x14] sm:$0xf]
      %v259 = vld [vmem:[%s1 + $0x18] sm:$0xf]
      %v260 = vld [vmem:[%s1 + $0x1c] sm:$0xf]
      %v261 = vld [vmem:[%s1 + $0x20] sm:$0xf]
      %v262 = vld [vmem:[%s1 + $0x24] sm:$0xf]
      %v263 = vld [vmem:[%s1 + $0x28] sm:$0xf]
      %v264 = vld [vmem:[%s1 + $0x2c] sm:$0xf]
      %v265 = vld [vmem:[%s1 + $0x30] sm:$0xf]
      %v266 = vld [vmem:[%s1 + $0x34] sm:$0xf]
      %v267 = vld [vmem:[%s1 + $0x38] sm:$0xf]
      %v268 = vld [vmem:[%s1 + $0x3c] sm:$0xf]
      %v269 = vld [vmem:[%s1 + $0x40] sm:$0xf]
      %v270 = vld [vmem:[%s1 + $0x44] sm:$0xf]
      %v271 = vld [vmem:[%s1 + $0x48] sm:$0xf]
      %v272 = vld [vmem:[%s1 + $0x4c] sm:$0xf]
      %v273 = vld [vmem:[%s1 + $0x50] sm:$0xf]
      %v274 = vld [vmem:[%s1 + $0x54] sm:$0xf]
      %v275 = vld [vmem:[%s1 + $0x58] sm:$0xf]
      %v276 = vld [vmem:[%s1 + $0x5c] sm:$0xf]
      %v277 = vld [vmem:[%s1 + $0x60] sm:$0xf]
      %v278 = vld [vmem:[%s1 + $0x64] sm:$0xf]
      %v279 = vld [vmem:[%s1 + $0x68] sm:$0xf]
      %v280 = vld [vmem:[%s1 + $0x6c] sm:$0xf]
      %v281 = vld [vmem:[%s1 + $0x70] sm:$0xf]
      %v282 = vld [vmem:[%s1 + $0x74] sm:$0xf]
      %v283 = vld [vmem:[%s1 + $0x78] sm:$0xf]
      %v284 = vld [vmem:[%s1 + $0x7c] sm:$0xf]
      %v285 = vld [vmem:[%s1 + $0x80] sm:$0xf]
      %v286 = vld [vmem:[%s1 + $0x84] sm:$0xf]
      %v287 = vld [vmem:[%s1 + $0x88] sm:$0xf]
      %v288 = vld [vmem:[%s1 + $0x8c] sm:$0xf]
      %v289 = vld [vmem:[%s1 + $0x90] sm:$0xf]
      %v290 = vld [vmem:[%s1 + $0x94] sm:$0xf]
      %v291 = vld [vmem:[%s1 + $0x98] sm:$0xf]
      %v292 = vld [vmem:[%s1 + $0x9c] sm:$0xf]
      %v293 = vld [vmem:[%s1 + $0xa0] sm:$0xf]
      %v294 = vld [vmem:[%s1 + $0xa4] sm:$0xf]
      %v295 = vld [vmem:[%s1 + $0xa8] sm:$0xf]
      %v296 = vld [vmem:[%s1 + $0xac] sm:$0xf]
      %v297 = vld [vmem:[%s1 + $0xb0] sm:$0xf]
      %v298 = vld [vmem:[%s1 + $0xb4] sm:$0xf]
      %v299 = vld [vmem:[%s1 + $0xb8] sm:$0xf]
      %v300 = vld [vmem:[%s1 + $0xbc] sm:$0xf]
      %v301 = vld [vmem:[%s1 + $0xc0] sm:$0xf]
      %v302 = vld [vmem:[%s1 + $0xc4] sm:$0xf]
      %v303 = vld [vmem:[%s1 + $0xc8] sm:$0xf]
      %v304 = vld [vmem:[%s1 + $0xcc] sm:$0xf]
      %v305 = vld [vmem:[%s1 + $0xd0] sm:$0xf]
      %v306 = vld [vmem:[%s1 + $0xd4] sm:$0xf]
      %v307 = vld [vmem:[%s1 + $0xd8] sm:$0xf]
      %v308 = vld [vmem:[%s1 + $0xdc] sm:$0xf]
      %v309 = vld [vmem:[%s1 + $0xe0] sm:$0xf]
      %v310 = vld [vmem:[%s1 + $0xe4] sm:$0xf]
      %v311 = vld [vmem:[%s1 + $0xe8] sm:$0xf]
      %v312 = vld [vmem:[%s1 + $0xec] sm:$0xf]
      %v313 = vld [vmem:[%s1 + $0xf0] sm:$0xf]
      %v314 = vld [vmem:[%s1 + $0xf4] sm:$0xf]
      %v315 = vld [vmem:[%s1 + $0xf8] sm:$0xf]
      %v316 = vld [vmem:[%s1 + $0xfc] sm:$0xf]
      %v317 = vld [vmem:[%s1 + $0x100] sm:$0xf]
      %v318 = vld [vmem:[%s1 + $0x104] sm:$0xf]
      %v319 = vld [vmem:[%s1 + $0x108] sm:$0xf]
      %v320 = vld [vmem:[%s1 + $0x10c] sm:$0xf]
      %v321 = vld [vmem:[%s1 + $0x110] sm:$0xf]
      %v322 = vld [vmem:[%s1 + $0x114] sm:$0xf]
      %v323 = vld [vmem:[%s1 + $0x118] sm:$0xf]
      %v324 = vld [vmem:[%s1 + $0x11c] sm:$0xf]
      %v325 = vld [vmem:[%s1 + $0x120] sm:$0xf]
      %v326 = vld [vmem:[%s1 + $0x124] sm:$0xf]
      %v327 = vld [vmem:[%s1 + $0x128] sm:$0xf]
      %v328 = vld [vmem:[%s1 + $0x12c] sm:$0xf]
      %v329 = vld [vmem:[%s1 + $0x130] sm:$0xf]
      %v330 = vld [vmem:[%s1 + $0x134] sm:$0xf]
      %v331 = vld [vmem:[%s1 + $0x138] sm:$0xf]
      %v332 = vld [vmem:[%s1 + $0x13c] sm:$0xf]
      %v333 = vld [vmem:[%s1 + $0x140] sm:$0xf]
      %v334 = vld [vmem:[%s1 + $0x144] sm:$0xf]
      %v335 = vld [vmem:[%s1 + $0x148] sm:$0xf]
      %v336 = vld [vmem:[%s1 + $0x14c] sm:$0xf]
      %v337 = vld [vmem:[%s1 + $0x150] sm:$0xf]
      %v338 = vld [vmem:[%s1 + $0x154] sm:$0xf]
      %v339 = vld [vmem:[%s1 + $0x158] sm:$0xf]
      %v340 = vld [vmem:[%s1 + $0x15c] sm:$0xf]
      %v341 = vld [vmem:[%s1 + $0x160] sm:$0xf]
      %v342 = vld [vmem:[%s1 + $0x164] sm:$0xf]
      %v343 = vld [vmem:[%s1 + $0x168] sm:$0xf]
      %v344 = vld [vmem:[%s1 + $0x16c] sm:$0xf]
      %v345 = vld [vmem:[%s1 + $0x170] sm:$0xf]
      %v346 = vld [vmem:[%s1 + $0x174] sm:$0xf]
      %v347 = vld [vmem:[%s1 + $0x178] sm:$0xf]
      %v348 = vld [vmem:[%s1 + $0x17c] sm:$0xf]
      %v349 = vld [vmem:[%s1 + $0x180] sm:$0xf]
      %v350 = vld [vmem:[%s1 + $0x184] sm:$0xf]
      %v351 = vld [vmem:[%s2] sm:$0x1]
      %v353 = vlaneseq
      %v354 = vshrl.u32 %v353, 7
      %v355 = vsub.s32 0, %v354
      %v356 = vrot.slane %v351, %v355
      %v456 = vunpack.c.l.b16 %v253
      %v457 = vunpack.c.l.b16 %v254
      %v458 = vunpack.c.l.b16 %v255
      %v459 = vunpack.c.l.b16 %v256
      %v460 = vunpack.c.l.b16 %v257
      %v461 = vunpack.c.l.b16 %v258
      %v462 = vunpack.c.l.b16 %v259
      %v463 = vunpack.c.l.b16 %v260
      %v464 = vunpack.c.l.b16 %v261
      %v465 = vunpack.c.l.b16 %v262
      %v466 = vunpack.c.l.b16 %v263
      %v467 = vunpack.c.l.b16 %v264
      %v468 = vunpack.c.l.b16 %v265
      %v469 = vunpack.c.l.b16 %v266
      %v470 = vunpack.c.l.b16 %v267
      %v471 = vunpack.c.l.b16 %v268
      %v472 = vunpack.c.l.b16 %v269
      %v473 = vunpack.c.l.b16 %v270
      %v474 = vunpack.c.l.b16 %v271
      %v475 = vunpack.c.l.b16 %v272
      %v476 = vunpack.c.l.b16 %v273
      %v477 = vunpack.c.l.b16 %v274
      %v478 = vunpack.c.l.b16 %v275
      %v479 = vunpack.c.l.b16 %v276
      %v480 = vunpack.c.l.b16 %v277
      %v481 = vunpack.c.l.b16 %v278
      %v482 = vunpack.c.l.b16 %v279
      %v483 = vunpack.c.l.b16 %v280
      %v484 = vunpack.c.l.b16 %v281
      %v485 = vunpack.c.l.b16 %v282
      %v486 = vunpack.c.l.b16 %v283
      %v487 = vunpack.c.l.b16 %v284
      %v488 = vunpack.c.l.b16 %v285
      %v489 = vunpack.c.l.b16 %v286
      %v490 = vunpack.c.l.b16 %v287
      %v491 = vunpack.c.l.b16 %v288
      %v492 = vunpack.c.l.b16 %v289
      %v493 = vunpack.c.l.b16 %v290
      %v494 = vunpack.c.l.b16 %v291
      %v495 = vunpack.c.l.b16 %v292
      %v496 = vunpack.c.l.b16 %v293
      %v497 = vunpack.c.l.b16 %v294
      %v498 = vunpack.c.l.b16 %v295
      %v499 = vunpack.c.l.b16 %v296
      %v500 = vunpack.c.l.b16 %v297
      %v501 = vunpack.c.l.b16 %v298
      %v502 = vunpack.c.l.b16 %v299
      %v503 = vunpack.c.l.b16 %v300
      %v504 = vunpack.c.l.b16 %v301
      %v505 = vunpack.c.l.b16 %v302
      %v506 = vunpack.c.l.b16 %v303
      %v507 = vunpack.c.l.b16 %v304
      %v508 = vunpack.c.l.b16 %v305
      %v509 = vunpack.c.l.b16 %v306
      %v510 = vunpack.c.l.b16 %v307
      %v511 = vunpack.c.l.b16 %v308
      %v512 = vunpack.c.l.b16 %v309
      %v513 = vunpack.c.l.b16 %v310
      %v514 = vunpack.c.l.b16 %v311
      %v515 = vunpack.c.l.b16 %v312
      %v516 = vunpack.c.l.b16 %v313
      %v517 = vunpack.c.l.b16 %v314
      %v518 = vunpack.c.l.b16 %v315
      %v519 = vunpack.c.l.b16 %v316
      %v520 = vunpack.c.l.b16 %v317
      %v521 = vunpack.c.l.b16 %v318
      %v522 = vunpack.c.l.b16 %v319
      %v523 = vunpack.c.l.b16 %v320
      %v524 = vunpack.c.l.b16 %v321
      %v525 = vunpack.c.l.b16 %v322
      %v526 = vunpack.c.l.b16 %v323
      %v527 = vunpack.c.l.b16 %v324
      %v528 = vunpack.c.l.b16 %v325
      %v529 = vunpack.c.l.b16 %v326
      %v530 = vunpack.c.l.b16 %v327
      %v531 = vunpack.c.l.b16 %v328
      %v532 = vunpack.c.l.b16 %v329
      %v533 = vunpack.c.l.b16 %v330
      %v534 = vunpack.c.l.b16 %v331
      %v535 = vunpack.c.l.b16 %v332
      %v536 = vunpack.c.l.b16 %v333
      %v537 = vunpack.c.l.b16 %v334
      %v538 = vunpack.c.l.b16 %v335
      %v539 = vunpack.c.l.b16 %v336
      %v540 = vunpack.c.l.b16 %v337
      %v541 = vunpack.c.l.b16 %v338
      %v542 = vunpack.c.l.b16 %v339
      %v543 = vunpack.c.l.b16 %v340
      %v544 = vunpack.c.l.b16 %v341
      %v545 = vunpack.c.l.b16 %v342
      %v546 = vunpack.c.l.b16 %v343
      %v547 = vunpack.c.l.b16 %v344
      %v548 = vunpack.c.l.b16 %v345
      %v549 = vunpack.c.l.b16 %v346
      %v550 = vunpack.c.l.b16 %v347
      %v551 = vunpack.c.l.b16 %v348
      %v552 = vunpack.c.l.b16 %v349
      %v553 = vunpack.c.l.b16 %v350
      %v554 = vpack.c.b16 %v457, %v456
      %v555 = vpack.c.b16 %v459, %v458
      %v556 = vpack.c.b16 %v461, %v460
      %v557 = vpack.c.b16 %v463, %v462
      %v558 = vpack.c.b16 %v465, %v464
      %v559 = vpack.c.b16 %v467, %v466
      %v560 = vpack.c.b16 %v469, %v468
      %v561 = vpack.c.b16 %v471, %v470
      %v562 = vpack.c.b16 %v473, %v472
      %v563 = vpack.c.b16 %v475, %v474
      %v564 = vpack.c.b16 %v477, %v476
      %v565 = vpack.c.b16 %v479, %v478
      %v566 = vpack.c.b16 %v481, %v480
      %v567 = vpack.c.b16 %v483, %v482
      %v568 = vpack.c.b16 %v485, %v484
      %v569 = vpack.c.b16 %v487, %v486
      %v570 = vpack.c.b16 %v489, %v488
      %v571 = vpack.c.b16 %v491, %v490
      %v572 = vpack.c.b16 %v493, %v492
      %v573 = vpack.c.b16 %v495, %v494
      %v574 = vpack.c.b16 %v497, %v496
      %v575 = vpack.c.b16 %v499, %v498
      %v576 = vpack.c.b16 %v501, %v500
      %v577 = vpack.c.b16 %v503, %v502
      %v578 = vpack.c.b16 %v505, %v504
      %v579 = vpack.c.b16 %v507, %v506
      %v580 = vpack.c.b16 %v509, %v508
      %v581 = vpack.c.b16 %v511, %v510
      %v582 = vpack.c.b16 %v513, %v512
      %v583 = vpack.c.b16 %v515, %v514
      %v584 = vpack.c.b16 %v517, %v516
      %v585 = vpack.c.b16 %v519, %v518
      %v586 = vpack.c.b16 %v521, %v520
      %v587 = vpack.c.b16 %v523, %v522
      %v588 = vpack.c.b16 %v525, %v524
      %v589 = vpack.c.b16 %v527, %v526
      %v590 = vpack.c.b16 %v529, %v528
      %v591 = vpack.c.b16 %v531, %v530
      %v592 = vpack.c.b16 %v533, %v532
      %v593 = vpack.c.b16 %v535, %v534
      %v594 = vpack.c.b16 %v537, %v536
      %v595 = vpack.c.b16 %v539, %v538
      %v596 = vpack.c.b16 %v541, %v540
      %v597 = vpack.c.b16 %v543, %v542
      %v598 = vpack.c.b16 %v545, %v544
      %v599 = vpack.c.b16 %v547, %v546
      %v600 = vpack.c.b16 %v549, %v548
      %v601 = vpack.c.b16 %v551, %v550
      %v602 = vpack.c.b16 %v553, %v552
      %vm652 = vcmask 130048
      %v654 = vsel %vm652, %v252, 0
      %656 = vmatprep.subr.bf16.mxu0 0
      %657 = vmatpush1.bf16.msra.mxu0 %v554
      %658 = vmatprep.subr.bf16.mxu0 0
      %659 = vmatpush1.bf16.msra.mxu0 %v555
      %660 = vmatprep.subr.bf16.mxu0 0
      %661 = vmatpush1.bf16.msra.mxu0 %v556
      %662 = vmatprep.subr.bf16.mxu0 0
      %663 = vmatpush1.bf16.msra.mxu0 %v557
      %664 = vmatprep.subr.bf16.mxu0 0
      %665 = vmatpush1.bf16.msra.mxu0 %v558
      %666 = vmatprep.subr.bf16.mxu0 0
      %667 = vmatpush1.bf16.msra.mxu0 %v559
      %668 = vmatprep.subr.bf16.mxu0 0
      %669 = vmatpush1.bf16.msra.mxu0 %v560
      %670 = vmatprep.subr.bf16.mxu0 0
      %671 = vmatpush1.bf16.msra.mxu0 %v561
      %672 = vmatprep.subr.bf16.mxu0 0
      %673 = vmatpush1.bf16.msra.mxu0 %v562
      %674 = vmatprep.subr.bf16.mxu0 0
      %675 = vmatpush1.bf16.msra.mxu0 %v563
      %676 = vmatprep.subr.bf16.mxu0 0
      %677 = vmatpush1.bf16.msra.mxu0 %v564
      %678 = vmatprep.subr.bf16.mxu0 0
      %679 = vmatpush1.bf16.msra.mxu0 %v565
      %680 = vmatprep.subr.bf16.mxu0 0
      %681 = vmatpush1.bf16.msra.mxu0 %v566
      %682 = vmatprep.subr.bf16.mxu0 0
      %683 = vmatpush1.bf16.msra.mxu0 %v567
      %684 = vmatprep.subr.bf16.mxu0 0
      %685 = vmatpush1.bf16.msra.mxu0 %v568
      %686 = vmatprep.subr.bf16.mxu0 0
      %687 = vmatpush1.bf16.msra.mxu0 %v569
      %688 = vmatprep.mubr.bf16.mxu0 %v247
      %689 = vmatmul.mubr.bf16.gmra.mrb[0].mxu0 %v246
      %v690 = vpop.f32.mrb[0].mxu0
      %v691 = vadd.f32 %v356, %v690
      %v692 = vpop.f32.mrb[0].mxu0
      %v693 = vpop.f32.mrb[0].mxu0
      %v694 = vadd.f32 %v356, %v693
      %v695 = vpop.f32.mrb[0].mxu0
      %696 = vdwg.mxu0
      %697 = vmatprep.subr.bf16.mxu0 0
      %698 = vmatpush1.bf16.msra.mxu0 %v570
      %699 = vmatprep.subr.bf16.mxu0 0
      %700 = vmatpush1.bf16.msra.mxu0 %v571
      %701 = vmatprep.subr.bf16.mxu0 0
      %702 = vmatpush1.bf16.msra.mxu0 %v572
      %703 = vmatprep.subr.bf16.mxu0 0
      %704 = vmatpush1.bf16.msra.mxu0 %v573
      %705 = vmatprep.subr.bf16.mxu0 0
      %706 = vmatpush1.bf16.msra.mxu0 %v574
      %707 = vmatprep.subr.bf16.mxu0 0
      %708 = vmatpush1.bf16.msra.mxu0 %v575
      %709 = vmatprep.subr.bf16.mxu0 0
      %710 = vmatpush1.bf16.msra.mxu0 %v576
      %711 = vmatprep.subr.bf16.mxu0 0
      %712 = vmatpush1.bf16.msra.mxu0 %v577
      %713 = vmatprep.subr.bf16.mxu0 0
      %714 = vmatpush1.bf16.msra.mxu0 %v578
      %715 = vmatprep.subr.bf16.mxu0 0
      %716 = vmatpush1.bf16.msra.mxu0 %v579
      %717 = vmatprep.subr.bf16.mxu0 0
      %718 = vmatpush1.bf16.msra.mxu0 %v580
      %719 = vmatprep.subr.bf16.mxu0 0
      %720 = vmatpush1.bf16.msra.mxu0 %v581
      %721 = vmatprep.subr.bf16.mxu0 0
      %722 = vmatpush1.bf16.msra.mxu0 %v582
      %723 = vmatprep.subr.bf16.mxu0 0
      %724 = vmatpush1.bf16.msra.mxu0 %v583
      %725 = vmatprep.subr.bf16.mxu0 0
      %726 = vmatpush1.bf16.msra.mxu0 %v584
      %727 = vmatprep.subr.bf16.mxu0 0
      %728 = vmatpush1.bf16.msra.mxu0 %v585
      %729 = vmatprep.mubr.bf16.mxu0 %v249
      %730 = vmatmul.mubr.bf16.gmra.mrb[0].mxu0 %v248
      %v731 = vpop.f32.mrb[0].mxu0
      %v732 = vadd.f32 %v691, %v731
      %v733 = vpop.f32.mrb[0].mxu0
      %v734 = vpop.f32.mrb[0].mxu0
      %v735 = vadd.f32 %v694, %v734
      %v736 = vpop.f32.mrb[0].mxu0
      %737 = vdwg.mxu0
      %738 = vmatprep.subr.bf16.mxu0 0
      %739 = vmatpush1.bf16.msra.mxu0 %v586
      %740 = vmatprep.subr.bf16.mxu0 0
      %741 = vmatpush1.bf16.msra.mxu0 %v587
      %742 = vmatprep.subr.bf16.mxu0 0
      %743 = vmatpush1.bf16.msra.mxu0 %v588
      %744 = vmatprep.subr.bf16.mxu0 0
      %745 = vmatpush1.bf16.msra.mxu0 %v589
      %746 = vmatprep.subr.bf16.mxu0 0
      %747 = vmatpush1.bf16.msra.mxu0 %v590
      %748 = vmatprep.subr.bf16.mxu0 0
      %749 = vmatpush1.bf16.msra.mxu0 %v591
      %750 = vmatprep.subr.bf16.mxu0 0
      %751 = vmatpush1.bf16.msra.mxu0 %v592
      %752 = vmatprep.subr.bf16.mxu0 0
      %753 = vmatpush1.bf16.msra.mxu0 %v593
      %754 = vmatprep.subr.bf16.mxu0 0
      %755 = vmatpush1.bf16.msra.mxu0 %v594
      %756 = vmatprep.subr.bf16.mxu0 0
      %757 = vmatpush1.bf16.msra.mxu0 %v595
      %758 = vmatprep.subr.bf16.mxu0 0
      %759 = vmatpush1.bf16.msra.mxu0 %v596
      %760 = vmatprep.subr.bf16.mxu0 0
      %761 = vmatpush1.bf16.msra.mxu0 %v597
      %762 = vmatprep.subr.bf16.mxu0 0
      %763 = vmatpush1.bf16.msra.mxu0 %v598
      %764 = vmatprep.subr.bf16.mxu0 0
      %765 = vmatpush1.bf16.msra.mxu0 %v599
      %766 = vmatprep.subr.bf16.mxu0 0
      %767 = vmatpush1.bf16.msra.mxu0 %v600
      %768 = vmatprep.subr.bf16.mxu0 0
      %769 = vmatpush1.bf16.msra.mxu0 %v601
      %770 = vmatprep.mubr.bf16.mxu0 %v251
      %771 = vmatmul.mubr.bf16.gmra.mrb[0].mxu0 %v250
      %v772 = vpop.f32.mrb[0].mxu0
      %v773 = vadd.f32 %v732, %v772
      %v774 = vpop.f32.mrb[0].mxu0
      %v775 = vpop.f32.mrb[0].mxu0
      %v776 = vadd.f32 %v735, %v775
      %v777 = vpop.f32.mrb[0].mxu0
      %778 = vdwg.mxu0
      %779 = vmatprep.subr.bf16.mxu0 0
      %780 = vmatpush1.bf16.msra.mxu0 %v602
      %781 = vmatprep.subr.bf16.mxu0 0
      %782 = vmatpush1.bf16.msra.mxu0 0
      %783 = vmatprep.subr.bf16.mxu0 0
      %784 = vmatpush1.bf16.msra.mxu0 0
      %785 = vmatprep.subr.bf16.mxu0 0
      %786 = vmatpush1.bf16.msra.mxu0 0
      %787 = vmatprep.subr.bf16.mxu0 0
      %788 = vmatpush1.bf16.msra.mxu0 0
      %789 = vmatprep.subr.bf16.mxu0 0
      %790 = vmatpush1.bf16.msra.mxu0 0
      %791 = vmatprep.subr.bf16.mxu0 0
      %792 = vmatpush1.bf16.msra.mxu0 0
      %793 = vmatprep.subr.bf16.mxu0 0
      %794 = vmatpush1.bf16.msra.mxu0 0
      %795 = vmatprep.subr.bf16.mxu0 0
      %796 = vmatpush1.bf16.msra.mxu0 0
      %797 = vmatprep.subr.bf16.mxu0 0
      %798 = vmatpush1.bf16.msra.mxu0 0
      %799 = vmatprep.subr.bf16.mxu0 0
      %800 = vmatpush1.bf16.msra.mxu0 0
      %801 = vmatprep.subr.bf16.mxu0 0
      %802 = vmatpush1.bf16.msra.mxu0 0
      %803 = vmatprep.subr.bf16.mxu0 0
      %804 = vmatpush1.bf16.msra.mxu0 0
      %805 = vmatprep.subr.bf16.mxu0 0
      %806 = vmatpush1.bf16.msra.mxu0 0
      %807 = vmatprep.subr.bf16.mxu0 0
      %808 = vmatpush1.bf16.msra.mxu0 0
      %809 = vmatprep.subr.bf16.mxu0 0
      %810 = vmatpush1.bf16.msra.mxu0 0
      %811 = vmatprep.mubr.bf16.mxu0 0
      %812 = vmatmul.mubr.bf16.gmra.mrb[0].mxu0 %v654
      %v813 = vpop.f32.mrb[0].mxu0
      %v814 = vadd.f32 %v773, %v813
      %v815 = vpop.f32.mrb[0].mxu0
      %v816 = vpop.f32.mrb[0].mxu0
      %v817 = vadd.f32 %v776, %v816
      %v818 = vpop.f32.mrb[0].mxu0
      %819 = vdwg.mxu0
      %v820 = vmax.f32 %v814, 0.0
      %v821 = vmax.f32 %v817, 0.0
      %v822 = vpack.c.bf16 %v821, %v820
      %v823 = vld [vmem:[%s3] sm:$0xf]
      %v824 = vld [vmem:[%s3 + $0x4] sm:$0xf]
      %v825 = vld [vmem:[%s3 + $0x8] sm:$0xf]
      %v826 = vld [vmem:[%s3 + $0xc] sm:$0xf]
      %v827 = vld [vmem:[%s3 + $0x10] sm:$0xf]
      %v828 = vld [vmem:[%s3 + $0x14] sm:$0xf]
      %v829 = vld [vmem:[%s3 + $0x18] sm:$0xf]
      %v830 = vld [vmem:[%s3 + $0x1c] sm:$0xf]
      %v831 = vld [vmem:[%s3 + $0x20] sm:$0xf]
      %v832 = vld [vmem:[%s3 + $0x24] sm:$0xf]
      %v833 = vld [vmem:[%s3 + $0x28] sm:$0xf]
      %v834 = vld [vmem:[%s3 + $0x2c] sm:$0xf]
      %v835 = vld [vmem:[%s3 + $0x30] sm:$0xf]
      %v836 = vld [vmem:[%s3 + $0x34] sm:$0xf]
      %v837 = vld [vmem:[%s3 + $0x38] sm:$0xf]
      %v838 = vld [vmem:[%s3 + $0x3c] sm:$0xf]
      %v839 = vld [vmem:[%s4] sm:$0x1]
      %v841 = vlaneseq
      %v842 = vshrl.u32 %v841, 7
      %v843 = vsub.s32 0, %v842
      %v844 = vrot.slane %v839, %v843
      %v862 = vunpack.c.l.b16 %v823
      %v863 = vunpack.c.l.b16 %v824
      %v864 = vunpack.c.l.b16 %v825
      %v865 = vunpack.c.l.b16 %v826
      %v866 = vunpack.c.l.b16 %v827
      %v867 = vunpack.c.l.b16 %v828
      %v868 = vunpack.c.l.b16 %v829
      %v869 = vunpack.c.l.b16 %v830
      %v870 = vunpack.c.l.b16 %v831
      %v871 = vunpack.c.l.b16 %v832
      %v872 = vunpack.c.l.b16 %v833
      %v873 = vunpack.c.l.b16 %v834
      %v874 = vunpack.c.l.b16 %v835
      %v875 = vunpack.c.l.b16 %v836
      %v876 = vunpack.c.l.b16 %v837
      %v877 = vunpack.c.l.b16 %v838
      %v878 = vpack.c.b16 %v863, %v862
      %v879 = vpack.c.b16 %v865, %v864
      %v880 = vpack.c.b16 %v867, %v866
      %v881 = vpack.c.b16 %v869, %v868
      %v882 = vpack.c.b16 %v871, %v870
      %v883 = vpack.c.b16 %v873, %v872
      %v884 = vpack.c.b16 %v875, %v874
      %v885 = vpack.c.b16 %v877, %v876
      %894 = vmatprep.subr.bf16.mxu0 0
      %895 = vmatpush1.bf16.msra.mxu0 %v878
      %896 = vmatprep.subr.bf16.mxu0 0
      %897 = vmatpush1.bf16.msra.mxu0 %v879
      %898 = vmatprep.subr.bf16.mxu0 0
      %899 = vmatpush1.bf16.msra.mxu0 %v880
      %900 = vmatprep.subr.bf16.mxu0 0
      %901 = vmatpush1.bf16.msra.mxu0 %v881
      %902 = vmatprep.subr.bf16.mxu0 0
      %903 = vmatpush1.bf16.msra.mxu0 %v882
      %904 = vmatprep.subr.bf16.mxu0 0
      %905 = vmatpush1.bf16.msra.mxu0 %v883
      %906 = vmatprep.subr.bf16.mxu0 0
      %907 = vmatpush1.bf16.msra.mxu0 %v884
      %908 = vmatprep.subr.bf16.mxu0 0
      %909 = vmatpush1.bf16.msra.mxu0 %v885
      %910 = vmatprep.subr.bf16.mxu0 0
      %911 = vmatpush1.bf16.msra.mxu0 0
      %912 = vmatprep.subr.bf16.mxu0 0
      %913 = vmatpush1.bf16.msra.mxu0 0
      %914 = vmatprep.subr.bf16.mxu0 0
      %915 = vmatpush1.bf16.msra.mxu0 0
      %916 = vmatprep.subr.bf16.mxu0 0
      %917 = vmatpush1.bf16.msra.mxu0 0
      %918 = vmatprep.subr.bf16.mxu0 0
      %919 = vmatpush1.bf16.msra.mxu0 0
      %920 = vmatprep.subr.bf16.mxu0 0
      %921 = vmatpush1.bf16.msra.mxu0 0
      %922 = vmatprep.subr.bf16.mxu0 0
      %923 = vmatpush1.bf16.msra.mxu0 0
      %924 = vmatprep.subr.bf16.mxu0 0
      %925 = vmatpush1.bf16.msra.mxu0 0
      %926 = vmatprep.mubr.bf16.mxu0 0
      %927 = vmatmul.mubr.bf16.gmra.mrb[0].mxu0 %v822
      %v928 = vpop.f32.mrb[0].mxu0
      %v929 = vadd.f32 %v844, %v928
      %v930 = vpop.f32.mrb[0].mxu0
      %v931 = vpop.f32.mrb[0].mxu0
      %v932 = vadd.f32 %v844, %v931
      %v933 = vpop.f32.mrb[0].mxu0
      %934 = vdwg.mxu0
      %v935 = vpack.c.bf16 %v932, %v929
      %v937 = vunpack.c.l.b16 %v935
      %v938 = vunpack.c.h.b16 %v935
      %v939 = vpack.c.b16 %v937, %v937
      %v940 = vpack.c.b16 %v938, %v938
      %943 = vst [vmem:[%s229] sm:$0xf] %v939
      %944 = vst [vmem:[%s229 + $0x4] sm:$0xf] %v940
      %s945 = smul.u32 2, %s16
      %p946 = scmp.lt.s32.totalorder %s945, 3
      %s947 = scalar_select %p946, %s945, 3
      %s948 = smul.addr %s947, 4
      %s949 = scalar_lea.vmem %s5, %s948
      // Predicated region
      $region41: #{simple_nn_forward.1} parent=39 // pred_check
        %p950 = pneg %p144
      $region42: #{simple_nn_forward.1} parent=39 // pred_check_branch
        %952 = sbr.rel (%p950) target = $region44
      $region43: #{simple_nn_forward.1} parent=39 // pred_region
        %s953 = smul.u32 2, %s16
      $region44: #{simple_nn_forward.1} parent=39 // pred_fallthru
        _
    $region40: #{simple_nn_forward.1} parent=5 // pred_fallthru
      _
    %p954 = scmp.le.s32.totalorder 2, %s11
    // Predicated region
    $region45: #{simple_nn_forward.1} parent=5 // pred_check
      %p955 = pneg %p954
    $region46: #{simple_nn_forward.1} parent=5 // pred_check_branch
      %957 = sbr.rel (%p955) target = $region48
    $region47: #{simple_nn_forward.1} parent=5 // pred_region
      %s958 = ssub.s32 %s11, 2
      // Predicated region
      $region49: #{simple_nn_forward.1} parent=47 // pred_check
        %p959 = pneg %p150
      $region50: #{simple_nn_forward.1} parent=47 // pred_check_branch
        %961 = sbr.rel (%p959) target = $region52
      $region51: #{simple_nn_forward.1} parent=47 // pred_region
        %s962 = smul.u32 2, %s17
        %p963 = scmp.lt.s32.totalorder %s962, 3
        %s964 = scalar_select %p963, %s962, 3
        %s965 = smul.addr %s964, 4
        %s966 = scalar_lea.vmem %s5, %s965
      $region52: #{simple_nn_forward.1} parent=47 // pred_fallthru
        _
    $region48: #{simple_nn_forward.1} parent=5 // pred_fallthru
      _
  $region6: #{simple_nn_forward.1} parent=0 // loop_footer
    %s15 = sadd.s32 1, %s11
  $region7: #{simple_nn_forward.1} parent=0 // loop_footer_branch
    %10 = sbr.rel target = $region3
  $region8: #{simple_nn_forward.1} parent=0 // loop_exit
    _

</llo_original>
